<compile_context>
chip_gen: v6e
topology: v6e:2x2x1
jax: 0.10.0
libtpu: 0.0.40
codegen_flags: <defaults>
</compile_context>

<pallas_src>
import functools

import jax
import jax.numpy as jnp
from jax import lax
from jax.experimental import pallas as pl
from jax.experimental.pallas import tpu as pltpu

NUM_EMBEDDINGS = 1024
EMBEDDING_DIM = 128  # lane-dense (multiple of 128)


def _round_up(x: int, m: int) -> int:
    return ((x + m - 1) // m) * m


def _sublane(dtype) -> int:
    # dtype-correct sublane packing multiple: 8 (f32), 16 (bf16), 32 (int8/fp8)
    return max(8, 32 // jnp.dtype(dtype).itemsize)


# --------------------------- tensor path: block copy -------------------------
def _copy_rows_kernel(w_ref, o_ref):
    # pure tile copy; runs at HBM roofline with double-buffered DMA
    o_ref[...] = w_ref[...]


def slice_embedding_rows(weight: jax.Array, length: int) -> jax.Array:
    """weight[:length] as a pipelined Pallas block copy (unpadded output)."""
    num_emb, d = weight.shape
    assert length <= num_emb, "length exceeds num_embeddings"
    sub = _sublane(weight.dtype)
    # Fixed large tile + cdiv grid: Pallas clips the ragged final block. This avoids
    # the old "largest divisor" search that could collapse to 8-row tiles.
    row_tile = min(512, _round_up(length, sub))
    n_tiles = pl.cdiv(length, row_tile)

    # NOTE: the final input block may extend past `length` (still inside `weight`,
    # since length <= num_embeddings); those rows are clipped on the output store.
    return pl.pallas_call(
        _copy_rows_kernel,
        out_shape=jax.ShapeDtypeStruct((length, d), weight.dtype),
        grid=(n_tiles,),
        in_specs=[pl.BlockSpec((row_tile, d), lambda i: (i, 0))],
        out_specs=pl.BlockSpec((row_tile, d), lambda i: (i, 0)),
        compiler_params=pltpu.CompilerParams(dimension_semantics=("parallel",)),
    )(weight)


# ------------------ gather path: K-chunked one-hot on the MXU ----------------
def _gather_onehot_kernel(pos_ref, w_ref, o_ref, acc_ref, *, k_chunk):
    """acc += onehot(pos, chunk k) @ weight_chunk; store on last chunk."""
    k = pl.program_id(1)

    @pl.when(k == 0)
    def _():
        acc_ref[...] = jnp.zeros_like(acc_ref)

    pos = pos_ref[...]                                         # (row_tile, 1) int32
    cols = k * k_chunk + lax.broadcasted_iota(jnp.int32, (pos.shape[0], k_chunk), 1)
    onehot = (cols == pos).astype(w_ref.dtype)                 # (row_tile, k_chunk)
    acc_ref[...] += jnp.dot(onehot, w_ref[...], preferred_element_type=jnp.float32)

    @pl.when(k == pl.num_programs(1) - 1)
    def _():
        o_ref[...] = acc_ref[...].astype(o_ref.dtype)


# -------------- gather path: blocked row assembly (exact, any dtype) ---------
def _gather_blocked_kernel(pos_ref, w_ref, o_ref, *, sub):
    """Assemble `sub` gathered rows, then one unmasked full-width store."""
    tile = o_ref.shape[0]
    base = pl.program_id(0) * tile

    def body(g, carry):
        start = pl.multiple_of(g * sub, sub)
        rows = [w_ref[pl.ds(pos_ref[base + start + j], 1), :] for j in range(sub)]
        o_ref[pl.ds(start, sub), :] = jnp.concatenate(rows, axis=0)
        return carry

    # Latency/scalar-slot bound (serialized SMEM pos reads + 8 dynamic row loads per
    # group), NOT store bound -> unroll so the LLO scheduler co-issues across groups.
    trips = max(1, tile // sub)
    lax.fori_loop(0, trips, body, 0, unroll=min(8, trips))


def gather_embedding_rows(weight: jax.Array, positions: jax.Array, *,
                          row_tile: int | None = None,
                          use_mxu: bool | None = None) -> jax.Array:
    """out[i] = weight[positions[i]] using a tiled Pallas gather kernel."""
    num_emb, d = weight.shape
    n = positions.shape[0]
    sub = _sublane(weight.dtype)

    if use_mxu is None:
        # MXU one-hot gather is exact for bf16 tables; keep f32 on the exact
        # blocked path so results match the reference gather bit-for-bit.
        use_mxu = weight.dtype == jnp.bfloat16
    if row_tile is None:
        row_tile = min(256, _round_up(n, sub))
    row_tile = max(sub, _round_up(row_tile, sub))

    n_tiles = pl.cdiv(n, row_tile)
    n_pad = n_tiles * row_tile
    # Clamp (PyTorch raises on OOB; VMEM refs have no bounds check) and pad the tiny
    # positions array so padded lanes only ever gather row 0 (clipped on store).
    pos = jnp.clip(positions.astype(jnp.int32), 0, num_emb - 1)
    pos = jnp.pad(pos, (0, n_pad - n))

    if use_mxu:
        # K-chunk the one-hot: keeps the (row_tile, k_chunk) intermediate small and
        # avoids keeping the whole table VMEM-resident (v7x 32 MiB scoped budget).
        k_chunk = 256 if num_emb % 256 == 0 else num_emb
        n_k = num_emb // k_chunk
        pos_col = pos.reshape(n_pad, 1)
        out = pl.pallas_call(
            functools.partial(_gather_onehot_kernel, k_chunk=k_chunk),
            out_shape=jax.ShapeDtypeStruct((n, d), weight.dtype),
            grid=(n_tiles, n_k),
            in_specs=[pl.BlockSpec((row_tile, 1), lambda i, k: (i, 0)),
                      pl.BlockSpec((k_chunk, d), lambda i, k: (k, 0))],
            out_specs=pl.BlockSpec((row_tile, d), lambda i, k: (i, 0)),
            scratch_shapes=[pltpu.VMEM((row_tile, d), jnp.float32)],
            compiler_params=pltpu.CompilerParams(
                dimension_semantics=("parallel", "arbitrary")),
        )(pos_col, weight)
    else:
        # TODO(synk): jnp.take on the resident table would remove the per-row loop
        # entirely; kept on the blocked+unrolled path for guaranteed Mosaic lowering.
        out = pl.pallas_call(
            functools.partial(_gather_blocked_kernel, sub=sub),
            out_shape=jax.ShapeDtypeStruct((n, d), weight.dtype),
            grid_spec=pltpu.PrefetchScalarGridSpec(
                num_scalar_prefetch=1,
                grid=(n_tiles,),
                in_specs=[pl.BlockSpec((num_emb, d), lambda i, p: (0, 0))],  # resident
                out_specs=pl.BlockSpec((row_tile, d), lambda i, p: (i, 0)),
            ),
            compiler_params=pltpu.CompilerParams(dimension_semantics=("parallel",)),
        )(pos, weight)
    return out


# ------------------------------ module wrappers -------------------------------
def positional_embedding_forward(weight: jax.Array, x: jax.Array, dim: int = -2) -> jax.Array:
    """Tensor path: equivalent to `self.weight[: x.size()[dim]]` (block copy)."""
    return slice_embedding_rows(weight, x.shape[dim])


def positional_embedding_packed(weight: jax.Array, batch_sizes) -> jax.Array:
    """PackedSequence path: gather the time-step index of every packed token.

    batch_sizes is the PackedSequence.batch_sizes metadata (static ints here):
    major_sizes_to_ptr(batch_sizes=[3,2,1]) -> positions [0,0,0,1,1,2].
    """
    # TODO(synk): PackedSequence is a PyTorch container; only its batch_sizes
    # metadata is consumed (host-side glue) — the gather runs in the Pallas kernel.
    positions = jnp.concatenate(
        [jnp.full((int(b),), t, dtype=jnp.int32) for t, b in enumerate(batch_sizes)]
    )
    return gather_embedding_rows(weight, positions)


def init_weight(key, num_embeddings=NUM_EMBEDDINGS, embedding_dim=EMBEDDING_DIM,
                dtype=jnp.float32):
    # bert_normal_: normal init with std=0.02 (truncation omitted), deterministic.
    return (jax.random.normal(key, (num_embeddings, embedding_dim)) * 0.02).astype(dtype)


if __name__ == "__main__":
    key = jax.random.PRNGKey(0)
    k_w, k_x = jax.random.split(key)

    weight = init_weight(k_w)                          # (1024, 128) f32
    x = jax.random.normal(k_x, (2, 8, EMBEDDING_DIM))  # batch=2, seq=8, hidden=128

    # --- Tensor path: contiguous slice -> block-copy kernel (single block) ---
    out = jax.block_until_ready(positional_embedding_forward(weight, x, dim=-2))
    assert out.shape == (8, EMBEDDING_DIM) and out.dtype == weight.dtype
    assert jnp.array_equal(out, weight[: x.shape[-2]]), "tensor-path mismatch"

    # --- Tensor path: ragged multi-tile copy (length=600 -> 2 blocks of 512) ---
    out600 = jax.block_until_ready(slice_embedding_rows(weight, 600))
    assert out600.shape == (600, EMBEDDING_DIM)
    assert jnp.array_equal(out600, weight[:600]), "ragged block-copy mismatch"

    # --- PackedSequence path, f32 -> exact blocked gather (single tile) ---
    batch_sizes = [2, 2, 2, 1, 1]  # 5 time steps, 8 packed tokens
    out_packed = jax.block_until_ready(positional_embedding_packed(weight, batch_sizes))
    ref_pos = jnp.concatenate(
        [jnp.full((b,), t, dtype=jnp.int32) for t, b in enumerate(batch_sizes)])
    assert out_packed.shape == (8, EMBEDDING_DIM)
    assert jnp.array_equal(out_packed, weight[ref_pos]), "packed-path mismatch"

    # --- f32 blocked gather, ragged multi-tile grid (n=20, row_tile=8 -> 3 tiles) ---
    bs2 = [8, 8, 4]
    pos2 = jnp.concatenate([jnp.full((b,), t, dtype=jnp.int32) for t, b in enumerate(bs2)])
    out2 = jax.block_until_ready(gather_embedding_rows(weight, pos2, row_tile=8))
    assert out2.shape == (20, EMBEDDING_DIM)
    assert jnp.array_equal(out2, weight[pos2]), "multi-tile blocked gather mismatch"

    # --- bf16 table -> K-chunked one-hot MXU gather, ragged multi-tile grid ---
    w_bf16 = weight.astype(jnp.bfloat16)
    bs3 = [8, 8, 4]
    pos3 = jnp.concatenate([jnp.full((b,), t, dtype=jnp.int32) for t, b in enumerate(bs3)])
    out3 = jax.block_until_ready(gather_embedding_rows(w_bf16, pos3, row_tile=16))
    assert out3.shape == (20, EMBEDDING_DIM) and out3.dtype == jnp.bfloat16
    assert jnp.allclose(out3.astype(jnp.float32),
                        w_bf16[pos3].astype(jnp.float32)), "MXU one-hot gather mismatch"

    print("KERNEL_OK")
</pallas_src>

<mosaic_0001>
module attributes {stable_mosaic.version = 11 : i64} {
  func.func @_copy_rows_kernel(%arg0: i32, %arg1: memref<8x128xf32, #tpu.memory_space<vmem>>, %arg2: memref<8x128xf32, #tpu.memory_space<vmem>>) attributes {dimension_semantics = [#tpu.dimension_semantics<parallel>], iteration_bounds = array<i64: 1>, scalar_prefetch = 0 : i64, scratch_operands = 0 : i64, tpu.core_type = #tpu.core_type<tc>, window_params = [{transform_indices = @transform_0, window_bounds = array<i64: 8, 128>}, {transform_indices = @transform_1, window_bounds = array<i64: 8, 128>}]} {
    %c0 = arith.constant 0 : index
    %c0_0 = arith.constant 0 : index
    %0 = vector.load %arg1[%c0, %c0_0] : memref<8x128xf32, #tpu.memory_space<vmem>>, vector<8x128xf32>
    %c0_1 = arith.constant 0 : index
    %c0_2 = arith.constant 0 : index
    %1 = vector.load %arg2[%c0_1, %c0_2] : memref<8x128xf32, #tpu.memory_space<vmem>>, vector<8x128xf32>
    tpu.vector_store %arg2[%c0_1, %c0_2], %0 {strides = array<i32>} : memref<8x128xf32, #tpu.memory_space<vmem>>, vector<8x128xf32>,
    return
  }
  func.func @transform_0(%arg0: i32) -> (i32, i32) {
    %c0_i32 = arith.constant 0 : i32
    %c0_i32_0 = arith.constant 0 : i32
    return %arg0, %c0_i32 : i32, i32
  }
  func.func @transform_1(%arg0: i32) -> (i32, i32) {
    %c0_i32 = arith.constant 0 : i32
    %c0_i32_0 = arith.constant 0 : i32
    return %arg0, %c0_i32 : i32, i32
  }
}

</mosaic_0001>

<llo_original>
// kernel: tpu_custom_call.1
$region0: #{tpu_custom_call.1}
  #allocation0 [shape = 'u32[]', space=smem, size = 0x4, offset = 0x4, fixed_abs, tag = 'smem constant byte address 0x4 - core index']
  #allocation1 [shape = 'u32[144,128]{1,0:T(1,128)}', space=vmem, size = 0x12000, scoped, tag = 'internal scratch']
  %s0 = inlined_call_operand.hbm [shape: f32[1024,128], index: 0, kind: input, shape index: {}]
  %s1 = inlined_call_operand.hbm [shape: f32[8,128], index: 1, kind: output, shape index: {}]
  %s2 = sld [smem:[#allocation0]]
  $region18: #{tpu_custom_call.1} parent=0
    _
  %s4 = ssub.s32 1, %s2
  %s5 = scalar_select 0, %s4, %s2
  $region1: #{tpu_custom_call.1} parent=0
    #allocation2 [shape = 'u8[4096]{0}', space=vmem, size = 0x1000, scoped, tag = 'input window, operand 0, single buffered']
    #allocation3 [shape = 's32[1]{0}', space=sflag, size = 0x4, scoped, tag = 'scoped memory for tpu_custom_call.1']
    #allocation4 [shape = 's32[1]{0}', space=sflag, size = 0x4, scoped, tag = 'scoped memory for tpu_custom_call.1']
    #allocation5 [shape = 'u8[4096]{0}', space=vmem, size = 0x1000, scoped, tag = 'output window, operand 0, single buffered']
    %6 = vsyncpa [#allocation3], 0
    %7 = vsyncpa [#allocation4], 0
    // Predicated region
    $region2: #{tpu_custom_call.1} parent=1 // pred_check
      _
    $region3: #{tpu_custom_call.1} parent=1 // pred_check_branch
      %9 = sbr.rel (0) target = $region5
    $region4: #{tpu_custom_call.1} parent=1 // pred_region
      %s11 = ssub.s32 128, 128
      %12 = vsyncadd [#allocation3], %s11
      %s14 = sshll.u32 [#allocation2], 4
      %s15 = int_to_ptr.vmem [resolvable:$true] %s14
      %17 = dma.hbm_to_vmem [thread:$0]  %s0, 128, %s15, [#allocation3]
    $region5: #{tpu_custom_call.1} parent=1 // pred_fallthru
      _
    // Predicated region
    $region6: #{tpu_custom_call.1} parent=1 // pred_check
      _
    $region7: #{tpu_custom_call.1} parent=1 // pred_check_branch
      %19 = sbr.rel (0) target = $region9
    $region8: #{tpu_custom_call.1} parent=1 // pred_region
      %20 = dma.done [#allocation3], 128
    $region9: #{tpu_custom_call.1} parent=1 // pred_fallthru
      _
    %v21 = vld [vmem:[#allocation2] sm:$0xff]
    %22 = vst [vmem:[#allocation5] sm:$0xff] %v21
    // Predicated region
    $region10: #{tpu_custom_call.1} parent=1 // pred_check
      _
    $region11: #{tpu_custom_call.1} parent=1 // pred_check_branch
      %24 = sbr.rel (0) target = $region13
    $region12: #{tpu_custom_call.1} parent=1 // pred_region
      %s26 = ssub.s32 128, 128
      %27 = vsyncadd [#allocation4], %s26
      %s29 = sshll.u32 [#allocation5], 4
      %s30 = int_to_ptr.vmem [resolvable:$true] %s29
      %32 = dma.vmem_to_hbm [thread:$0]  %s30, 128, %s1, [#allocation4]
    $region13: #{tpu_custom_call.1} parent=1 // pred_fallthru
      _
    // Predicated region
    $region14: #{tpu_custom_call.1} parent=1 // pred_check
      _
    $region15: #{tpu_custom_call.1} parent=1 // pred_check_branch
      %34 = sbr.rel (0) target = $region17
    $region16: #{tpu_custom_call.1} parent=1 // pred_region
      %35 = dma.done [#allocation4], 128
    $region17: #{tpu_custom_call.1} parent=1 // pred_fallthru
      _
    %36 = vsyncpa [#allocation3], 1
    %37 = vsyncpa [#allocation4], 1

</llo_original>
